<compile_context>
chip_gen: v7x
topology: tpu7x:2x2x1
jax: 0.10.0
libtpu: 0.0.40
codegen_flags: <defaults>
</compile_context>

<pallas_src>
import functools

import jax
import jax.numpy as jnp
from jax.experimental import pallas as pl
from jax.experimental.pallas import tpu as pltpu


_HK_CAP = 512  # max Hp chunk whose f32 intermediate is kept live at once


def _round_up(x, m):
    return ((x + m - 1) // m) * m


def _embedding_kernel(x_ref, w1_ref, b1_ref, w2_ref, b2_ref, o_ref):
    """One batch tile of the shared embedding MLP (all refs in VMEM).

    x_ref  : (TM, Dp) bf16    w1_ref : (Dp, Hp) bf16   b1_ref : (1, Hp) bf16
    w2_ref : (Hp, Ep) bf16    b2_ref : (1, Ep)  bf16   o_ref  : (TM, Ep) f32
    """
    x = x_ref[...]
    tm = x_ref.shape[0]
    hp = w1_ref.shape[1]
    ep = o_ref.shape[1]

    acc = jnp.zeros((tm, ep), jnp.float32)
    # Chunk Hp so the f32 hidden intermediate stays bounded (review item).
    for h0 in range(0, hp, _HK_CAP):
        h1 = min(h0 + _HK_CAP, hp)
        # Layer 1: MXU (bf16 in / f32 accumulate), bias + ReLU in f32 on VPU.
        h = jnp.dot(x, w1_ref[:, h0:h1], preferred_element_type=jnp.float32)
        h = jnp.maximum(h + b1_ref[:, h0:h1].astype(jnp.float32), 0.0)
        # Layer 2 partial: MXU, accumulate in f32.
        acc = acc + jnp.dot(h.astype(w2_ref.dtype), w2_ref[h0:h1, :],
                            preferred_element_type=jnp.float32)
    o_ref[...] = (acc + b2_ref[...].astype(jnp.float32)).astype(o_ref.dtype)


def make_embedding_net(d_in, hidden, emb_dim, dtype=jnp.float32,
                       compute_dtype=jnp.bfloat16, seed=0):
    """Deterministic params.  Returns (f32 params, bf16 lane-padded params)."""
    k1, k2, k3, k4 = jax.random.split(jax.random.PRNGKey(seed), 4)
    w1 = (jax.random.uniform(k1, (d_in, hidden), dtype, -1.0, 1.0)
          / jnp.sqrt(jnp.array(d_in, dtype)))
    b1 = (jax.random.uniform(k2, (1, hidden), dtype, -1.0, 1.0)
          / jnp.sqrt(jnp.array(d_in, dtype)))
    w2 = (jax.random.uniform(k3, (hidden, emb_dim), dtype, -1.0, 1.0)
          / jnp.sqrt(jnp.array(hidden, dtype)))
    b2 = (jax.random.uniform(k4, (1, emb_dim), dtype, -1.0, 1.0)
          / jnp.sqrt(jnp.array(hidden, dtype)))
    params = (w1, b1, w2, b2)

    dp = _round_up(d_in, 128)
    hp = _round_up(hidden, 128)
    ep = _round_up(emb_dim, 128)

    def pad2(a, rows, cols):
        return jnp.pad(a.astype(compute_dtype),
                       ((0, rows - a.shape[0]), (0, cols - a.shape[1])))

    padded_params = (pad2(w1, dp, hp), pad2(b1, 1, hp),
                     pad2(w2, hp, ep), pad2(b2, 1, ep))
    return params, padded_params


def _fused_embed(x, padded_params, emb_dim, tm_max):
    """Shared embedding MLP on a stacked (N, D) slab in ONE pallas_call."""
    w1p, b1p, w2p, b2p = padded_params
    dp, hp = w1p.shape
    ep = w2p.shape[1]
    cdt = w1p.dtype                      # compute dtype fed to the MXU (bf16)
    n, d_in = x.shape
    out_dtype = x.dtype

    # --- balanced batch tiles -----------------------------------------------
    tm_max = max(8, (int(tm_max) // 8) * 8)          # enforce sublane align
    num_tiles = pl.cdiv(n, tm_max)
    if num_tiles < 2 and n >= 16:
        num_tiles = 2                    # keep both v7x TensorCores busy
    tm = _round_up(pl.cdiv(n, num_tiles), 8)
    n_pad = num_tiles * tm

    # --- single-pass input prep (cast + pad; no extra HBM round trips) ------
    xp = x.astype(cdt)
    if n_pad != n or dp != d_in:
        xp = jnp.pad(xp, ((0, n_pad - n), (0, dp - d_in)))

    # --- VMEM budget / compiler params ---------------------------------------
    wb = jnp.dtype(cdt).itemsize
    weight_bytes = (dp * hp + hp + hp * ep + ep) * wb
    vmem_needed = (2 * tm * dp * wb                  # double-buffered x tiles
                   + 2 * tm * ep * 4                 # double-buffered out tiles
                   + 2 * weight_bytes                # weights (worst case 2x)
                   + tm * min(hp, _HK_CAP) * 4       # f32 hidden chunk
                   + tm * ep * 4)                    # f32 accumulator
    try:
        vmem_cap = int(pltpu.get_tpu_info().vmem_capacity_bytes)
    except Exception:
        vmem_cap = 64 << 20              # v7x-safe fallback (64 MiB per TC)
    vmem_limit = int(min(max(2 * vmem_needed, 32 << 20),
                         int(vmem_cap * 3 // 4)))

    def _resident_spec(shape):
        # Grid-invariant block (weights/biases): DMA'd once, stays in VMEM.
        idx = lambda i: (0, 0)
        if 2 * weight_bytes > (4 << 20):
            # Big resident weights: default double-buffering holds two copies
            # for nothing -> single-buffer to reclaim VMEM (review item).
            try:
                return pl.BlockSpec(shape, idx, pipeline_mode=pl.Buffered(1))
            except Exception:
                return pl.BlockSpec(shape, idx)
        return pl.BlockSpec(shape, idx)

    flops = 2 * n_pad * (dp * hp + hp * ep)
    bytes_accessed = n_pad * dp * wb + weight_bytes + n_pad * ep * 4

    out_padded = pl.pallas_call(
        _embedding_kernel,
        out_shape=jax.ShapeDtypeStruct((n_pad, ep), out_dtype),
        grid=(num_tiles,),
        in_specs=[
            pl.BlockSpec((tm, dp), lambda i: (i, 0)),
            _resident_spec((dp, hp)),
            _resident_spec((1, hp)),
            _resident_spec((hp, ep)),
            _resident_spec((1, ep)),
        ],
        out_specs=pl.BlockSpec((tm, ep), lambda i: (i, 0)),
        compiler_params=pltpu.CompilerParams(
            dimension_semantics=("parallel",),
            vmem_limit_bytes=vmem_limit),
        cost_estimate=pl.CostEstimate(
            flops=flops, transcendentals=0, bytes_accessed=bytes_accessed),
    )(xp, w1p, b1p, w2p, b2p)

    # Row slice restores (N, emb_dim) semantics; the 128->emb_dim lane
    # narrowing is done exactly once, here.
    # TODO(synk): for very large weights on v7x, add a K grid axis over Hp so
    # only a (Dp, Hk)/(Hk, Ep) weight slice is VMEM-resident per step.
    return out_padded[:n, :emb_dim]


@functools.partial(jax.jit, static_argnames=("emb_dim", "tm_max"))
def triplet_net_forward(padded_params, x1, x2, x3, *, emb_dim, tm_max=512):
    """TripletNet.forward: one shared embedding net on three inputs, fused
    into a single pallas_call (weights DMA'd once, one launch)."""
    b = x1.shape[0]
    x = jnp.concatenate([x1, x2, x3], axis=0)        # (3B, D_in)
    out = _fused_embed(x, padded_params, emb_dim, tm_max)
    return out[:b], out[b:2 * b], out[2 * b:]


@functools.partial(jax.jit, static_argnames=("emb_dim", "tm_max"))
def get_embedding(padded_params, x, *, emb_dim, tm_max=512):
    """TripletNet.get_embedding: single-branch path (no concat needed)."""
    return _fused_embed(x, padded_params, emb_dim, tm_max)


if __name__ == "__main__":
    # Small shapes consistent with a (B, D_in) embedding-net forward.
    B, D_IN, HIDDEN, EMB = 8, 64, 128, 32

    key = jax.random.PRNGKey(0)
    kx1, kx2, kx3 = jax.random.split(key, 3)
    x1 = jax.random.normal(kx1, (B, D_IN), jnp.float32)
    x2 = jax.random.normal(kx2, (B, D_IN), jnp.float32)
    x3 = jax.random.normal(kx3, (B, D_IN), jnp.float32)

    params, padded_params = make_embedding_net(D_IN, HIDDEN, EMB, seed=0)

    o1, o2, o3 = triplet_net_forward(padded_params, x1, x2, x3, emb_dim=EMB)
    jax.block_until_ready((o1, o2, o3))

    # Pure-JAX reference with the same bf16 rounding of inputs/weights
    # (f32 compute), matching the kernel's bf16-in / f32-accumulate matmuls.
    w1, b1, w2, b2 = params
    r = lambda a: a.astype(jnp.bfloat16).astype(jnp.float32)

    def ref_embed(x):
        h = jnp.maximum(r(x) @ r(w1) + r(b1), 0.0)
        return r(h) @ r(w2) + r(b2)

    r1, r2, r3 = ref_embed(x1), ref_embed(x2), ref_embed(x3)
    assert o1.shape == (B, EMB) and o2.shape == (B, EMB) and o3.shape == (B, EMB)
    assert jnp.allclose(o1, r1, atol=1e-2, rtol=1e-2), "branch 1 mismatch"
    assert jnp.allclose(o2, r2, atol=1e-2, rtol=1e-2), "branch 2 mismatch"
    assert jnp.allclose(o3, r3, atol=1e-2, rtol=1e-2), "branch 3 mismatch"

    # Also check the single-branch get_embedding path.
    e1 = get_embedding(padded_params, x1, emb_dim=EMB)
    jax.block_until_ready(e1)
    assert jnp.allclose(e1, r1, atol=1e-2, rtol=1e-2), "get_embedding mismatch"

    print("KERNEL_OK")
</pallas_src>

<mosaic_0001>
module attributes {stable_mosaic.version = 11 : i64} {
  func.func @_embedding_kernel(%arg0: i32, %arg1: memref<16x128xbf16, #tpu.memory_space<vmem>>, %arg2: memref<128x128xbf16, #tpu.memory_space<vmem>>, %arg3: memref<1x128xbf16, #tpu.memory_space<vmem>>, %arg4: memref<128x128xbf16, #tpu.memory_space<vmem>>, %arg5: memref<1x128xbf16, #tpu.memory_space<vmem>>, %arg6: memref<16x128xf32, #tpu.memory_space<vmem>>) attributes {dimension_semantics = [#tpu.dimension_semantics<parallel>], iteration_bounds = array<i64: 2>, scalar_prefetch = 0 : i64, scratch_operands = 0 : i64, tpu.core_type = #tpu.core_type<tc>, window_params = [{transform_indices = @transform_0, window_bounds = array<i64: 16, 128>}, {pipeline_mode = #tpu.pipeline_mode<synchronous>, transform_indices = @transform_1, window_bounds = array<i64: 128, 128>}, {pipeline_mode = #tpu.pipeline_mode<synchronous>, transform_indices = @transform_2, window_bounds = array<i64: 1, 128>}, {pipeline_mode = #tpu.pipeline_mode<synchronous>, transform_indices = @transform_3, window_bounds = array<i64: 128, 128>}, {pipeline_mode = #tpu.pipeline_mode<synchronous>, transform_indices = @transform_4, window_bounds = array<i64: 1, 128>}, {transform_indices = @transform_5, window_bounds = array<i64: 16, 128>}]} {
    %c0 = arith.constant 0 : index
    %c0_0 = arith.constant 0 : index
    %0 = vector.load %arg1[%c0, %c0_0] : memref<16x128xbf16, #tpu.memory_space<vmem>>, vector<16x128xbf16>
    %cst = arith.constant 0.000000e+00 : f32
    %1 = vector.broadcast %cst : f32 to vector<16x128xf32>
    %c0_1 = arith.constant 0 : index
    %c0_2 = arith.constant 0 : index
    %2 = vector.load %arg2[%c0_1, %c0_2] : memref<128x128xbf16, #tpu.memory_space<vmem>>, vector<128x128xbf16>
    %cst_3 = arith.constant dense<0.000000e+00> : vector<16x128xf32>
    %3 = tpu.matmul %0, %2, %cst_3 {dimension_numbers = #tpu.dot_dimension_numbers<[1], [0], [0], [1], [0, 0, 1, 1], [], []>} : vector<16x128xbf16>, vector<128x128xbf16>, vector<16x128xf32> -> vector<16x128xf32>
    %c0_4 = arith.constant 0 : index
    %c0_5 = arith.constant 0 : index
    %4 = vector.load %arg3[%c0_4, %c0_5] : memref<1x128xbf16, #tpu.memory_space<vmem>>, vector<1x128xbf16>
    %5 = arith.extf %4 : vector<1x128xbf16> to vector<1x128xf32>
    %6 = vector.broadcast %5 : vector<1x128xf32> to vector<16x128xf32>
    %7 = arith.addf %3, %6 : vector<16x128xf32>
    %cst_6 = arith.constant 0.000000e+00 : f32
    %8 = vector.broadcast %cst_6 : f32 to vector<16x128xf32>
    %9 = arith.maximumf %7, %8 : vector<16x128xf32>
    %10 = arith.truncf %9 : vector<16x128xf32> to vector<16x128xbf16>
    %c0_7 = arith.constant 0 : index
    %c0_8 = arith.constant 0 : index
    %11 = vector.load %arg4[%c0_7, %c0_8] : memref<128x128xbf16, #tpu.memory_space<vmem>>, vector<128x128xbf16>
    %cst_9 = arith.constant dense<0.000000e+00> : vector<16x128xf32>
    %12 = tpu.matmul %10, %11, %cst_9 {dimension_numbers = #tpu.dot_dimension_numbers<[1], [0], [0], [1], [0, 0, 1, 1], [], []>} : vector<16x128xbf16>, vector<128x128xbf16>, vector<16x128xf32> -> vector<16x128xf32>
    %13 = arith.addf %1, %12 : vector<16x128xf32>
    %c0_10 = arith.constant 0 : index
    %c0_11 = arith.constant 0 : index
    %14 = vector.load %arg5[%c0_10, %c0_11] : memref<1x128xbf16, #tpu.memory_space<vmem>>, vector<1x128xbf16>
    %15 = arith.extf %14 : vector<1x128xbf16> to vector<1x128xf32>
    %16 = vector.broadcast %15 : vector<1x128xf32> to vector<16x128xf32>
    %17 = arith.addf %13, %16 : vector<16x128xf32>
    %c0_12 = arith.constant 0 : index
    %c0_13 = arith.constant 0 : index
    %18 = vector.load %arg6[%c0_12, %c0_13] : memref<16x128xf32, #tpu.memory_space<vmem>>, vector<16x128xf32>
    tpu.vector_store %arg6[%c0_12, %c0_13], %17 {strides = array<i32>} : memref<16x128xf32, #tpu.memory_space<vmem>>, vector<16x128xf32>,
    return
  }
  func.func @transform_0(%arg0: i32) -> (i32, i32) {
    %c0_i32 = arith.constant 0 : i32
    %c0_i32_0 = arith.constant 0 : i32
    return %arg0, %c0_i32 : i32, i32
  }
  func.func @transform_1(%arg0: i32) -> (i32, i32) {
    %c0_i32 = arith.constant 0 : i32
    %c0_i32_0 = arith.constant 0 : i32
    %c0_i32_1 = arith.constant 0 : i32
    return %c0_i32, %c0_i32_0 : i32, i32
  }
  func.func @transform_2(%arg0: i32) -> (i32, i32) {
    %c0_i32 = arith.constant 0 : i32
    %c0_i32_0 = arith.constant 0 : i32
    %c0_i32_1 = arith.constant 0 : i32
    return %c0_i32, %c0_i32_0 : i32, i32
  }
  func.func @transform_3(%arg0: i32) -> (i32, i32) {
    %c0_i32 = arith.constant 0 : i32
    %c0_i32_0 = arith.constant 0 : i32
    %c0_i32_1 = arith.constant 0 : i32
    return %c0_i32, %c0_i32_0 : i32, i32
  }
  func.func @transform_4(%arg0: i32) -> (i32, i32) {
    %c0_i32 = arith.constant 0 : i32
    %c0_i32_0 = arith.constant 0 : i32
    %c0_i32_1 = arith.constant 0 : i32
    return %c0_i32, %c0_i32_0 : i32, i32
  }
  func.func @transform_5(%arg0: i32) -> (i32, i32) {
    %c0_i32 = arith.constant 0 : i32
    %c0_i32_0 = arith.constant 0 : i32
    return %arg0, %c0_i32 : i32, i32
  }
}

</mosaic_0001>

<llo_original>
// kernel: triplet_net_forward.1
$region0: #{triplet_net_forward.1}
  #allocation0 [shape = 'u32[]', space=smem, size = 0x4, offset = 0x4, fixed_abs, tag = 'smem constant byte address 0x4 - core index']
  #allocation1 [shape = 'u32[144,128]{1,0:T(1,128)}', space=vmem, size = 0x12000, scoped, tag = 'internal scratch']
  %s0 = inlined_call_operand.vmem [shape: bf16[32,128], index: 0, kind: input, shape index: {}]
  %s1 = inlined_call_operand.hbm [shape: bf16[128,128], index: 1, kind: input, shape index: {}]
  %s2 = inlined_call_operand.vmem [shape: bf16[1,128], index: 2, kind: input, shape index: {}]
  %s3 = inlined_call_operand.vmem [shape: bf16[128,128], index: 3, kind: input, shape index: {}]
  %s4 = inlined_call_operand.vmem [shape: bf16[1,128], index: 4, kind: input, shape index: {}]
  %s5 = inlined_call_operand.vmem [shape: f32[32,128], index: 5, kind: output, shape index: {}]
  %s6 = sld [smem:[#allocation0]]
  $region57: #{triplet_net_forward.1} parent=0
    _
  %s8 = ssub.s32 1, %s6
  %s9 = scalar_select 0, %s8, %s6
  $region1: #{triplet_net_forward.1} parent=0
    #allocation2 [shape = 'u8[32768]{0}', space=vmem, size = 0x8000, scoped, tag = 'input window, operand 1, single buffered']
    #allocation3 [shape = 's32[2]{0}', space=sflag, size = 0x8, scoped, tag = 'scoped memory for triplet_net_forward.1']
    %10 = vsyncpa [#allocation3], 0
    loop: start=0, step=1, limit=4
    $region2: #{triplet_net_forward.1} parent=1 // loop_pre_header
      _
    $region3: #{triplet_net_forward.1} parent=1 // loop_header
      %s12 = sphi 0, %s16
      %p13 = scmp.ge.s32.totalorder %s12, 4
      %s22 = sphi 0, %s24
      %s25 = sphi 0, %s22
      %s26 = sphi 0, %s25
      %s42 = sphi 0, %s26
      %s46 = sphi 0, %s46
      %s48 = sphi 0, %s46
      %s49 = sphi 0, %s48
      %s63 = sphi 0, %s49
      %s67 = sphi 0, %s67
      %s69 = sphi 0, %s67
      %s70 = sphi 0, %s69
      %s84 = sphi 0, %s70
      %s88 = sphi 0, %s88
      %s90 = sphi 0, %s88
      %s91 = sphi 0, %s90
      %s105 = sphi 0, %s91
      %s109 = sphi 0, %s109
      %s111 = sphi 0, %s109
      %s112 = sphi 0, %s111
      %s126 = sphi 0, %s112
      %s132 = sphi 0, %s134
      %s135 = sphi 0, %s132
      %s136 = sphi 0, %s135
      %s152 = sphi 0, %s136
    $region4: #{triplet_net_forward.1} parent=1 // loop_header_branch
      %15 = sbr.rel (%p13) target = $region8
    $region5: #{triplet_net_forward.1} parent=1 // loop_body
      %s17 = ssub.s32 %s12, 1
      %s18 = ssub.s32 %s12, 2
      %s19 = sadd.s32 %s12, 1
      %s20 = ssub.s32 %s12, %s19
      %p21 = scmp.eq.s32.totalorder %s20, 0
      %s23 = sadd.s32 %s22, 1
      %s24 = scalar_select %p21, %s22, %s23
      %p27 = pneg %p21
      %p28 = scmp.eq.s32.totalorder %s12, 1
      %p29 = por %p27, %p28
      %p30 = scmp.ne.s32.totalorder %s22, %s25
      %p31 = scmp.eq.s32.totalorder %s12, 0
      %p32 = por %p30, %p31
      %p33 = scmp.ne.s32.totalorder %s22, %s25
      %p34 = scmp.eq.s32.totalorder %s17, 1
      %p35 = por %p33, %p34
      %p36 = scmp.ne.s32.totalorder %s25, %s26
      %p37 = scmp.eq.s32.totalorder %s17, 0
      %p38 = por %p36, %p37
      %p39 = scmp.ne.s32.totalorder %s25, %s26
      %p40 = scmp.eq.s32.totalorder %s18, 1
      %p41 = por %p39, %p40
      %p43 = scmp.ne.s32.totalorder %s26, %s42
      %p44 = scmp.eq.s32.totalorder %s18, 0
      %p45 = por %p43, %p44
      %s47 = sadd.s32 %s46, 1
      %p50 = scmp.eq.s32.totalorder %s12, 1
      %p51 = scmp.ne.s32.totalorder %s46, %s48
      %p52 = scmp.eq.s32.totalorder %s12, 0
      %p53 = por %p51, %p52
      %p54 = scmp.ne.s32.totalorder %s46, %s48
      %p55 = scmp.eq.s32.totalorder %s17, 1
      %p56 = por %p54, %p55
      %p57 = scmp.ne.s32.totalorder %s48, %s49
      %p58 = scmp.eq.s32.totalorder %s17, 0
      %p59 = por %p57, %p58
      %p60 = scmp.ne.s32.totalorder %s48, %s49
      %p61 = scmp.eq.s32.totalorder %s18, 1
      %p62 = por %p60, %p61
      %p64 = scmp.ne.s32.totalorder %s49, %s63
      %p65 = scmp.eq.s32.totalorder %s18, 0
      %p66 = por %p64, %p65
      %s68 = sadd.s32 %s67, 1
      %p71 = scmp.eq.s32.totalorder %s12, 1
      %p72 = scmp.ne.s32.totalorder %s67, %s69
      %p73 = scmp.eq.s32.totalorder %s12, 0
      %p74 = por %p72, %p73
      %p75 = scmp.ne.s32.totalorder %s67, %s69
      %p76 = scmp.eq.s32.totalorder %s17, 1
      %p77 = por %p75, %p76
      %p78 = scmp.ne.s32.totalorder %s69, %s70
      %p79 = scmp.eq.s32.totalorder %s17, 0
      %p80 = por %p78, %p79
      %p81 = scmp.ne.s32.totalorder %s69, %s70
      %p82 = scmp.eq.s32.totalorder %s18, 1
      %p83 = por %p81, %p82
      %p85 = scmp.ne.s32.totalorder %s70, %s84
      %p86 = scmp.eq.s32.totalorder %s18, 0
      %p87 = por %p85, %p86
      %s89 = sadd.s32 %s88, 1
      %p92 = scmp.eq.s32.totalorder %s12, 1
      %p93 = scmp.ne.s32.totalorder %s88, %s90
      %p94 = scmp.eq.s32.totalorder %s12, 0
      %p95 = por %p93, %p94
      %p96 = scmp.ne.s32.totalorder %s88, %s90
      %p97 = scmp.eq.s32.totalorder %s17, 1
      %p98 = por %p96, %p97
      %p99 = scmp.ne.s32.totalorder %s90, %s91
      %p100 = scmp.eq.s32.totalorder %s17, 0
      %p101 = por %p99, %p100
      %p102 = scmp.ne.s32.totalorder %s90, %s91
      %p103 = scmp.eq.s32.totalorder %s18, 1
      %p104 = por %p102, %p103
      %p106 = scmp.ne.s32.totalorder %s91, %s105
      %p107 = scmp.eq.s32.totalorder %s18, 0
      %p108 = por %p106, %p107
      %s110 = sadd.s32 %s109, 1
      %p113 = scmp.eq.s32.totalorder %s12, 1
      %p114 = scmp.ne.s32.totalorder %s109, %s111
      %p115 = scmp.eq.s32.totalorder %s12, 0
      %p116 = por %p114, %p115
      %p117 = scmp.ne.s32.totalorder %s109, %s111
      %p118 = scmp.eq.s32.totalorder %s17, 1
      %p119 = por %p117, %p118
      %p120 = scmp.ne.s32.totalorder %s111, %s112
      %p121 = scmp.eq.s32.totalorder %s17, 0
      %p122 = por %p120, %p121
      %p123 = scmp.ne.s32.totalorder %s111, %s112
      %p124 = scmp.eq.s32.totalorder %s18, 1
      %p125 = por %p123, %p124
      %p127 = scmp.ne.s32.totalorder %s112, %s126
      %p128 = scmp.eq.s32.totalorder %s18, 0
      %p129 = por %p127, %p128
      %s130 = ssub.s32 %s12, %s19
      %p131 = scmp.eq.s32.totalorder %s130, 0
      %s133 = sadd.s32 %s132, 1
      %s134 = scalar_select %p131, %s132, %s133
      %p137 = pneg %p131
      %p138 = scmp.eq.s32.totalorder %s12, 1
      %p139 = por %p137, %p138
      %p140 = scmp.ne.s32.totalorder %s132, %s135
      %p141 = scmp.eq.s32.totalorder %s12, 0
      %p142 = por %p140, %p141
      %p143 = scmp.ne.s32.totalorder %s132, %s135
      %p144 = scmp.eq.s32.totalorder %s17, 1
      %p145 = por %p143, %p144
      %p146 = scmp.ne.s32.totalorder %s135, %s136
      %p147 = scmp.eq.s32.totalorder %s17, 0
      %p148 = por %p146, %p147
      %p149 = scmp.ne.s32.totalorder %s135, %s136
      %p150 = scmp.eq.s32.totalorder %s18, 1
      %p151 = por %p149, %p150
      %p153 = scmp.ne.s32.totalorder %s136, %s152
      %p154 = scmp.eq.s32.totalorder %s18, 0
      %p155 = por %p153, %p154
      %p156 = scmp.le.s32.totalorder 1, %s12
      %p157 = scmp.lt.s32.totalorder %s12, 3
      %p158 = pnand %p156, %p157
      %p159 = pneg %p158
      // Predicated region
      $region9: #{triplet_net_forward.1} parent=5 // pred_check
        _
      $region10: #{triplet_net_forward.1} parent=5 // pred_check_branch
        %161 = sbr.rel (%p158) target = $region12
      $region11: #{triplet_net_forward.1} parent=5 // pred_region
        %s162 = ssub.s32 %s12, 1
        // Predicated region
        $region13: #{triplet_net_forward.1} parent=11 // pred_check
          %p163 = pneg %p59
        $region14: #{triplet_net_forward.1} parent=11 // pred_check_branch
          %165 = sbr.rel (%p163) target = $region16
        $region15: #{triplet_net_forward.1} parent=11 // pred_region
          %s167 = ssub.s32 1024, 1024
          %168 = vsyncadd [#allocation3], %s167
          %s169 = sshll.u32 [#allocation2], 4
          %s170 = int_to_ptr.vmem [resolvable:$true] %s169
          %175 = dma.hbm_to_vmem [thread:$0]  %s1, 1024, %s170, [#allocation3], 64, 64, 4
        $region16: #{triplet_net_forward.1} parent=11 // pred_fallthru
          _
        // Predicated region
        $region17: #{triplet_net_forward.1} parent=11 // pred_check
          %p176 = pneg %p80
        $region18: #{triplet_net_forward.1} parent=11 // pred_check_branch
          %178 = sbr.rel (%p176) target = $region20
        $region19: #{triplet_net_forward.1} parent=11 // pred_region
          _
        $region20: #{triplet_net_forward.1} parent=11 // pred_fallthru
          _
        // Predicated region
        $region21: #{triplet_net_forward.1} parent=11 // pred_check
          %p179 = pneg %p101
        $region22: #{triplet_net_forward.1} parent=11 // pred_check_branch
          %181 = sbr.rel (%p179) target = $region24
        $region23: #{triplet_net_forward.1} parent=11 // pred_region
          _
        $region24: #{triplet_net_forward.1} parent=11 // pred_fallthru
          _
        // Predicated region
        $region25: #{triplet_net_forward.1} parent=11 // pred_check
          %p182 = pneg %p122
        $region26: #{triplet_net_forward.1} parent=11 // pred_check_branch
          %184 = sbr.rel (%p182) target = $region28
        $region27: #{triplet_net_forward.1} parent=11 // pred_region
          _
        $region28: #{triplet_net_forward.1} parent=11 // pred_fallthru
          _
      $region12: #{triplet_net_forward.1} parent=5 // pred_fallthru
        _
      %p185 = scmp.lt.s32.totalorder %s12, 2
      // Predicated region
      $region29: #{triplet_net_forward.1} parent=5 // pred_check
        %p186 = pneg %p185
      $region30: #{triplet_net_forward.1} parent=5 // pred_check_branch
        %188 = sbr.rel (%p186) target = $region32
      $region31: #{triplet_net_forward.1} parent=5 // pred_region
        // Predicated region
        $region33: #{triplet_net_forward.1} parent=31 // pred_check
          %p189 = pneg %p32
        $region34: #{triplet_net_forward.1} parent=31 // pred_check_branch
          %191 = sbr.rel (%p189) target = $region36
        $region35: #{triplet_net_forward.1} parent=31 // pred_region
          %s192 = smul.u32 2, %s12
          %p193 = scmp.lt.s32.totalorder %s192, 3
          %s194 = scalar_select %p193, %s192, 3
          %s195 = smul.addr %s194, 4
          %s196 = scalar_lea.vmem %s0, %s195
          %s197 = smul.u32 2, %s12
        $region36: #{triplet_net_forward.1} parent=31 // pred_fallthru
          _
      $region32: #{triplet_net_forward.1} parent=5 // pred_fallthru
        _
      %p198 = scmp.le.s32.totalorder 1, %s12
      %p199 = scmp.lt.s32.totalorder %s12, 3
      %p200 = pnand %p198, %p199
      %p201 = pneg %p200
      // Predicated region
      $region37: #{triplet_net_forward.1} parent=5 // pred_check
        _
      $region38: #{triplet_net_forward.1} parent=5 // pred_check_branch
        %203 = sbr.rel (%p200) target = $region40
      $region39: #{triplet_net_forward.1} parent=5 // pred_region
        %s204 = ssub.s32 %s12, 1
        // Predicated region
        $region41: #{triplet_net_forward.1} parent=39 // pred_check
          %p205 = pneg %p59
        $region42: #{triplet_net_forward.1} parent=39 // pred_check_branch
          %207 = sbr.rel (%p205) target = $region44
        $region43: #{triplet_net_forward.1} parent=39 // pred_region
          %208 = dma.done [#allocation3], 1024
        $region44: #{triplet_net_forward.1} parent=39 // pred_fallthru
          _
        %s209 = smul.u32 2, %s17
        %p210 = scmp.lt.s32.totalorder %s209, 3
        %s211 = scalar_select %p210, %s209, 3
        %s212 = smul.addr %s211, 4
        %s213 = scalar_lea.vmem %s0, %s212
        %p214 = pneg %p38
        %p215 = pneg %p35
        %p216 = pneg %p59
        %p217 = pneg %p56
        %p218 = pneg %p80
        %p219 = pneg %p77
        %p220 = pneg %p101
        %p221 = pneg %p98
        %p222 = pneg %p122
        %p223 = pneg %p119
        %p224 = pneg %p148
        %p225 = pneg %p145
        %s226 = smul.u32 2, %s17
        %p227 = scmp.lt.s32.totalorder %s226, 3
        %s228 = scalar_select %p227, %s226, 3
        %s229 = smul.addr %s228, 8
        %s230 = scalar_lea.vmem %s5, %s229
        %s231 = smul.u32 2, %s17
        %p232 = scmp.lt.s32.totalorder %s231, 3
        %s233 = scalar_select %p232, %s231, 3
        %s234 = smul.addr %s233, 4
        %s235 = scalar_lea.vmem %s0, %s234
        %s236 = smul.u32 2, %s17
        %s237 = smul.u32 2, %s17
        %p238 = scmp.lt.s32.totalorder %s237, 3
        %s239 = scalar_select %p238, %s237, 3
        %s240 = smul.addr %s239, 8
        %s241 = scalar_lea.vmem %s5, %s240
        %s242 = smul.u32 2, %s17
        %v244 = vld [vmem:[%s235] sm:$0xf]
        %v245 = vld [vmem:[%s235 + $0x4] sm:$0xf]
        %v246 = vld [vmem:[#allocation2] sm:$0xf]
        %v247 = vld [vmem:[#allocation2 + $0x4] sm:$0xf]
        %v248 = vld [vmem:[#allocation2 + $0x8] sm:$0xf]
        %v249 = vld [vmem:[#allocation2 + $0xc] sm:$0xf]
        %v250 = vld [vmem:[#allocation2 + $0x10] sm:$0xf]
        %v251 = vld [vmem:[#allocation2 + $0x14] sm:$0xf]
        %v252 = vld [vmem:[#allocation2 + $0x18] sm:$0xf]
        %v253 = vld [vmem:[#allocation2 + $0x1c] sm:$0xf]
        %v254 = vld [vmem:[#allocation2 + $0x20] sm:$0xf]
        %v255 = vld [vmem:[#allocation2 + $0x24] sm:$0xf]
        %v256 = vld [vmem:[#allocation2 + $0x28] sm:$0xf]
        %v257 = vld [vmem:[#allocation2 + $0x2c] sm:$0xf]
        %v258 = vld [vmem:[#allocation2 + $0x30] sm:$0xf]
        %v259 = vld [vmem:[#allocation2 + $0x34] sm:$0xf]
        %v260 = vld [vmem:[#allocation2 + $0x38] sm:$0xf]
        %v261 = vld [vmem:[#allocation2 + $0x3c] sm:$0xf]
        %v262 = vld [vmem:[%s2] sm:$0x1]
        %v263 = vunpack.c.l.bf16 %v262
        %v264 = vlaneseq
        %v265 = vshrl.u32 %v264, 7
        %v266 = vsub.s32 0, %v265
        %v267 = vrot.slane %v263, %v266
        %v270 = vunpack.c.l.b16 %v244
        %v271 = vunpack.c.l.b16 %v245
        %v272 = vpack.c.b16 %v271, %v270
        %v290 = vunpack.c.l.b16 %v246
        %v291 = vunpack.c.l.b16 %v247
        %v292 = vunpack.c.l.b16 %v248
        %v293 = vunpack.c.l.b16 %v249
        %v294 = vunpack.c.l.b16 %v250
        %v295 = vunpack.c.l.b16 %v251
        %v296 = vunpack.c.l.b16 %v252
        %v297 = vunpack.c.l.b16 %v253
        %v298 = vunpack.c.l.b16 %v254
        %v299 = vunpack.c.l.b16 %v255
        %v300 = vunpack.c.l.b16 %v256
        %v301 = vunpack.c.l.b16 %v257
        %v302 = vunpack.c.l.b16 %v258
        %v303 = vunpack.c.l.b16 %v259
        %v304 = vunpack.c.l.b16 %v260
        %v305 = vunpack.c.l.b16 %v261
        %v306 = vpack.c.b16 %v291, %v290
        %v307 = vpack.c.b16 %v293, %v292
        %v308 = vpack.c.b16 %v295, %v294
        %v309 = vpack.c.b16 %v297, %v296
        %v310 = vpack.c.b16 %v299, %v298
        %v311 = vpack.c.b16 %v301, %v300
        %v312 = vpack.c.b16 %v303, %v302
        %v313 = vpack.c.b16 %v305, %v304
        %322 = vmatprep.subr.bf16.mxu0 0
        %323 = vmatpush1.bf16.msra.mxu0 %v306
        %324 = vmatprep.subr.bf16.mxu0 0
        %325 = vmatpush1.bf16.msra.mxu0 %v307
        %326 = vmatprep.subr.bf16.mxu0 0
        %327 = vmatpush1.bf16.msra.mxu0 %v308
        %328 = vmatprep.subr.bf16.mxu0 0
        %329 = vmatpush1.bf16.msra.mxu0 %v309
        %330 = vmatprep.subr.bf16.mxu0 0
        %331 = vmatpush1.bf16.msra.mxu0 %v310
        %332 = vmatprep.subr.bf16.mxu0 0
        %333 = vmatpush1.bf16.msra.mxu0 %v311
        %334 = vmatprep.subr.bf16.mxu0 0
        %335 = vmatpush1.bf16.msra.mxu0 %v312
        %336 = vmatprep.subr.bf16.mxu0 0
        %337 = vmatpush1.bf16.msra.mxu0 %v313
        %338 = vmatprep.subr.bf16.mxu0 0
        %339 = vmatpush1.bf16.msra.mxu0 0
        %340 = vmatprep.subr.bf16.mxu0 0
        %341 = vmatpush1.bf16.msra.mxu0 0
        %342 = vmatprep.subr.bf16.mxu0 0
        %343 = vmatpush1.bf16.msra.mxu0 0
        %344 = vmatprep.subr.bf16.mxu0 0
        %345 = vmatpush1.bf16.msra.mxu0 0
        %346 = vmatprep.subr.bf16.mxu0 0
        %347 = vmatpush1.bf16.msra.mxu0 0
        %348 = vmatprep.subr.bf16.mxu0 0
        %349 = vmatpush1.bf16.msra.mxu0 0
        %350 = vmatprep.subr.bf16.mxu0 0
        %351 = vmatpush1.bf16.msra.mxu0 0
        %352 = vmatprep.subr.bf16.mxu0 0
        %353 = vmatpush1.bf16.msra.mxu0 0
        %354 = vmatprep.mubr.bf16.mxu0 0
        %355 = vmatmul.mubr.bf16.gmra.mrb[0].mxu0 %v272
        %v356 = vpop.f32.mrb[0].mxu0
        %v357 = vadd.f32 %v267, %v356
        %v358 = vpop.f32.mrb[0].mxu0
        %v359 = vpop.f32.mrb[0].mxu0
        %v360 = vadd.f32 %v267, %v359
        %v361 = vpop.f32.mrb[0].mxu0
        %362 = vdwg.mxu0
        %v363 = vmax.f32 %v357, 0.0
        %v364 = vmax.f32 %v360, 0.0
        %v365 = vpack.c.bf16 %v364, %v363
        %v366 = vld [vmem:[%s3] sm:$0xf]
        %v367 = vld [vmem:[%s3 + $0x4] sm:$0xf]
        %v368 = vld [vmem:[%s3 + $0x8] sm:$0xf]
        %v369 = vld [vmem:[%s3 + $0xc] sm:$0xf]
        %v370 = vld [vmem:[%s3 + $0x10] sm:$0xf]
        %v371 = vld [vmem:[%s3 + $0x14] sm:$0xf]
        %v372 = vld [vmem:[%s3 + $0x18] sm:$0xf]
        %v373 = vld [vmem:[%s3 + $0x1c] sm:$0xf]
        %v374 = vld [vmem:[%s3 + $0x20] sm:$0xf]
        %v375 = vld [vmem:[%s3 + $0x24] sm:$0xf]
        %v376 = vld [vmem:[%s3 + $0x28] sm:$0xf]
        %v377 = vld [vmem:[%s3 + $0x2c] sm:$0xf]
        %v378 = vld [vmem:[%s3 + $0x30] sm:$0xf]
        %v379 = vld [vmem:[%s3 + $0x34] sm:$0xf]
        %v380 = vld [vmem:[%s3 + $0x38] sm:$0xf]
        %v381 = vld [vmem:[%s3 + $0x3c] sm:$0xf]
        %v382 = vld [vmem:[%s4] sm:$0x1]
        %v383 = vunpack.c.l.bf16 %v382
        %v384 = vlaneseq
        %v385 = vshrl.u32 %v384, 7
        %v386 = vsub.s32 0, %v385
        %v387 = vrot.slane %v383, %v386
        %v404 = vunpack.c.l.b16 %v366
        %v405 = vunpack.c.l.b16 %v367
        %v406 = vunpack.c.l.b16 %v368
        %v407 = vunpack.c.l.b16 %v369
        %v408 = vunpack.c.l.b16 %v370
        %v409 = vunpack.c.l.b16 %v371
        %v410 = vunpack.c.l.b16 %v372
        %v411 = vunpack.c.l.b16 %v373
        %v412 = vunpack.c.l.b16 %v374
        %v413 = vunpack.c.l.b16 %v375
        %v414 = vunpack.c.l.b16 %v376
        %v415 = vunpack.c.l.b16 %v377
        %v416 = vunpack.c.l.b16 %v378
        %v417 = vunpack.c.l.b16 %v379
        %v418 = vunpack.c.l.b16 %v380
        %v419 = vunpack.c.l.b16 %v381
        %v420 = vpack.c.b16 %v405, %v404
        %v421 = vpack.c.b16 %v407, %v406
        %v422 = vpack.c.b16 %v409, %v408
        %v423 = vpack.c.b16 %v411, %v410
        %v424 = vpack.c.b16 %v413, %v412
        %v425 = vpack.c.b16 %v415, %v414
        %v426 = vpack.c.b16 %v417, %v416
        %v427 = vpack.c.b16 %v419, %v418
        %436 = vmatprep.subr.bf16.mxu0 0
        %437 = vmatpush1.bf16.msra.mxu0 %v420
        %438 = vmatprep.subr.bf16.mxu0 0
        %439 = vmatpush1.bf16.msra.mxu0 %v421
        %440 = vmatprep.subr.bf16.mxu0 0
        %441 = vmatpush1.bf16.msra.mxu0 %v422
        %442 = vmatprep.subr.bf16.mxu0 0
        %443 = vmatpush1.bf16.msra.mxu0 %v423
        %444 = vmatprep.subr.bf16.mxu0 0
        %445 = vmatpush1.bf16.msra.mxu0 %v424
        %446 = vmatprep.subr.bf16.mxu0 0
        %447 = vmatpush1.bf16.msra.mxu0 %v425
        %448 = vmatprep.subr.bf16.mxu0 0
        %449 = vmatpush1.bf16.msra.mxu0 %v426
        %450 = vmatprep.subr.bf16.mxu0 0
        %451 = vmatpush1.bf16.msra.mxu0 %v427
        %452 = vmatprep.subr.bf16.mxu0 0
        %453 = vmatpush1.bf16.msra.mxu0 0
        %454 = vmatprep.subr.bf16.mxu0 0
        %455 = vmatpush1.bf16.msra.mxu0 0
        %456 = vmatprep.subr.bf16.mxu0 0
        %457 = vmatpush1.bf16.msra.mxu0 0
        %458 = vmatprep.subr.bf16.mxu0 0
        %459 = vmatpush1.bf16.msra.mxu0 0
        %460 = vmatprep.subr.bf16.mxu0 0
        %461 = vmatpush1.bf16.msra.mxu0 0
        %462 = vmatprep.subr.bf16.mxu0 0
        %463 = vmatpush1.bf16.msra.mxu0 0
        %464 = vmatprep.subr.bf16.mxu0 0
        %465 = vmatpush1.bf16.msra.mxu0 0
        %466 = vmatprep.subr.bf16.mxu0 0
        %467 = vmatpush1.bf16.msra.mxu0 0
        %468 = vmatprep.mubr.bf16.mxu0 0
        %469 = vmatmul.mubr.bf16.gmra.mrb[0].mxu0 %v365
        %v470 = vpop.f32.mrb[0].mxu0
        %v471 = vadd.f32 %v387, %v470
        %v472 = vpop.f32.mrb[0].mxu0
        %v473 = vpop.f32.mrb[0].mxu0
        %v474 = vadd.f32 %v387, %v473
        %v475 = vpop.f32.mrb[0].mxu0
        %476 = vdwg.mxu0
        %477 = vst [vmem:[%s241] sm:$0xff] %v471
        %478 = vst [vmem:[%s241 + $0x8] sm:$0xff] %v474
        %s479 = smul.u32 2, %s17
        %p480 = scmp.lt.s32.totalorder %s479, 3
        %s481 = scalar_select %p480, %s479, 3
        %s482 = smul.addr %s481, 8
        %s483 = scalar_lea.vmem %s5, %s482
        // Predicated region
        $region45: #{triplet_net_forward.1} parent=39 // pred_check
          %p484 = pneg %p145
        $region46: #{triplet_net_forward.1} parent=39 // pred_check_branch
          %486 = sbr.rel (%p484) target = $region48
        $region47: #{triplet_net_forward.1} parent=39 // pred_region
          %s487 = smul.u32 2, %s17
        $region48: #{triplet_net_forward.1} parent=39 // pred_fallthru
          _
      $region40: #{triplet_net_forward.1} parent=5 // pred_fallthru
        _
      %p488 = scmp.le.s32.totalorder 2, %s12
      // Predicated region
      $region49: #{triplet_net_forward.1} parent=5 // pred_check
        %p489 = pneg %p488
      $region50: #{triplet_net_forward.1} parent=5 // pred_check_branch
        %491 = sbr.rel (%p489) target = $region52
      $region51: #{triplet_net_forward.1} parent=5 // pred_region
        %s492 = ssub.s32 %s12, 2
        // Predicated region
        $region53: #{triplet_net_forward.1} parent=51 // pred_check
          %p493 = pneg %p151
        $region54: #{triplet_net_forward.1} parent=51 // pred_check_branch
          %495 = sbr.rel (%p493) target = $region56
        $region55: #{triplet_net_forward.1} parent=51 // pred_region
          %s496 = smul.u32 2, %s18
          %p497 = scmp.lt.s32.totalorder %s496, 3
          %s498 = scalar_select %p497, %s496, 3
          %s499 = smul.addr %s498, 8
          %s500 = scalar_lea.vmem %s5, %s499
        $region56: #{triplet_net_forward.1} parent=51 // pred_fallthru
          _
      $region52: #{triplet_net_forward.1} parent=5 // pred_fallthru
        _
    $region6: #{triplet_net_forward.1} parent=1 // loop_footer
      %s16 = sadd.s32 1, %s12
    $region7: #{triplet_net_forward.1} parent=1 // loop_footer_branch
      %11 = sbr.rel target = $region3
    $region8: #{triplet_net_forward.1} parent=1 // loop_exit
      _
    %501 = vsyncpa [#allocation3], 1
    %s502 = scalar_lea.sflag [#allocation3], 1
    %503 = vsyncpa %s502, 1

</llo_original>
